<compile_context>
chip_gen: v7x
topology: tpu7x:2x2x1
jax: 0.10.0
libtpu: 0.0.40
codegen_flags: <defaults>
</compile_context>

<pallas_src>
import functools

import jax
import jax.numpy as jnp
from jax import lax
from jax.experimental import pallas as pl
from jax.experimental.pallas import tpu as pltpu


def residual_block_kernel(x_ref, w1_ref, b1_ref, w2_ref, b2_ref, o_ref, *, img_h):
    """NB stacked images per grid step, lane-dense (NB*H, W*C) layout.

    x_ref : (M, WC)      stacked input rows (M = NB*H, WC = W*C), f32
    w1_ref: (3, WC, WC)  conv1 weights (kh planes), block-banded over W, bf16
    b1_ref: (1, WC)      conv1 bias tiled over W, f32
    w2_ref: (3, WC, WC)  conv2 weights, bf16
    b2_ref: (1, WC)      conv2 bias, f32
    o_ref : (M, WC)      stacked output rows, f32
    """
    M = o_ref.shape[0]
    x = x_ref[...]                                          # f32 (M, WC)

    # Per-image top/bottom row masks: zero the rolled-in rows so the sublane
    # roll implements "SAME" zero padding along H and stacked images don't
    # bleed into each other.
    row = lax.broadcasted_iota(jnp.int32, (M, 1), 0)
    top = (row % img_h) == 0
    bot = (row % img_h) == (img_h - 1)

    def conv3x3(v, w_ref, b_ref):
        # v[i-1] / v[i+1] via XLU sublane rolls (otherwise-idle slot), masked
        # at image boundaries.
        up = jnp.where(top, 0.0, pltpu.roll(v, shift=1, axis=0))
        dn = jnp.where(bot, 0.0, pltpu.roll(v, shift=M - 1, axis=0))
        # Three accumulated MXU pushes against the kh weight planes
        # (bf16 operands, f32 accumulate); bias folded into the epilogue.
        acc = jnp.dot(up.astype(jnp.bfloat16), w_ref[0],
                      preferred_element_type=jnp.float32)
        acc += jnp.dot(v.astype(jnp.bfloat16), w_ref[1],
                       preferred_element_type=jnp.float32)
        acc += jnp.dot(dn.astype(jnp.bfloat16), w_ref[2],
                       preferred_element_type=jnp.float32)
        return acc + b_ref[...]

    h = jnp.maximum(conv3x3(x, w1_ref, b1_ref), 0.0)        # conv1 + ReLU (f32)
    y = conv3x3(h, w2_ref, b2_ref)                          # conv2
    o_ref[...] = (y + x).astype(o_ref.dtype)                # residual add


def _build_banded_weight(w_hwio, W):
    """(3,3,Cin,Cout) HWIO kernel -> (3, W*Cin, W*Cout) banded kh-planes.

    Plane kh acts on input row i+kh-1.  Entry [kh, w_in*Cin+ci, w_out*Cout+co]
    is K[kh, kw, ci, co] with kw = w_in - w_out + 1 when |w_in - w_out| <= 1,
    zero otherwise (the zero blocks implement SAME zero padding along W).
    Built with one einsum — no per-block .at[].set trace blowup.
    """
    _, _, cin, cout = w_hwio.shape
    kw = lax.broadcasted_iota(jnp.int32, (3, W, W), 0)
    w_in = lax.broadcasted_iota(jnp.int32, (3, W, W), 1)
    w_out = lax.broadcasted_iota(jnp.int32, (3, W, W), 2)
    sel = (w_in == w_out + kw - 1).astype(w_hwio.dtype)             # (3, W, W)
    big = jnp.einsum("kab,hkio->haibo", sel, w_hwio)                # (3,W,Ci,W,Co)
    return big.reshape(3, W * cin, W * cout)


def _images_per_step(n, h, target_m=256, max_m=1024):
    """Images stacked per grid step: aim for M = NB*H >= target_m (fills the
    MXU on v6e/v7x; >=128 already fills v5e) while keeping >=2 parallel grid
    steps when N allows (v7x has 2 TensorCores), with a VMEM-friendly cap."""
    divs = [d for d in range(1, n + 1) if n % d == 0]
    good = [d for d in divs if d * h >= target_m and (n // d) >= 2]
    if good:
        return min(good)
    fits = [d for d in divs if d * h <= max_m]
    return max(fits) if fits else 1


@jax.jit
def residual_block(x_nhwc, w1, b1, w2, b2):
    """x_nhwc: (N, H, W, C) float32.  w*: (3,3,C,C) HWIO, b*: (C,)."""
    N, H, W, C = x_nhwc.shape
    WC = W * C
    NB = _images_per_step(N, H)
    G = N // NB
    M = NB * H

    x2 = x_nhwc.reshape(G, M, WC)              # lane-dense, contiguous view
    # Weights in bf16 for the MXU (f32 accumulation in-kernel); bias stays f32.
    w1_big = _build_banded_weight(w1, W).astype(jnp.bfloat16)
    w2_big = _build_banded_weight(w2, W).astype(jnp.bfloat16)
    b1_big = jnp.tile(b1, W).reshape(1, WC).astype(jnp.float32)
    b2_big = jnp.tile(b2, W).reshape(1, WC).astype(jnp.float32)

    # TODO(synk): for large nf/W (e.g. nf=64, W>=32) the banded weight grows as
    # 3*(W*C)^2 (won't fit v7x's 64 MiB VMEM, and does ~W/3x redundant FLOPs):
    # tile W into 128-256-lane groups with halo (or per-kw matmuls), set
    # vmem_limit_bytes, and mark the grid-invariant weight/bias BlockSpecs
    # pipeline_mode=pl.Buffered(1) to drop their double-buffering.
    out2 = pl.pallas_call(
        functools.partial(residual_block_kernel, img_h=H),
        out_shape=jax.ShapeDtypeStruct((G, M, WC), x_nhwc.dtype),
        grid_spec=pltpu.PrefetchScalarGridSpec(
            num_scalar_prefetch=0,
            grid=(G,),
            in_specs=[
                pl.BlockSpec((None, M, WC), lambda g: (g, 0, 0)),
                pl.BlockSpec((3, WC, WC), lambda g: (0, 0, 0)),
                pl.BlockSpec((1, WC), lambda g: (0, 0)),
                pl.BlockSpec((3, WC, WC), lambda g: (0, 0, 0)),
                pl.BlockSpec((1, WC), lambda g: (0, 0)),
            ],
            out_specs=pl.BlockSpec((None, M, WC), lambda g: (g, 0, 0)),
        ),
        compiler_params=pltpu.CompilerParams(
            dimension_semantics=("parallel",),
        ),
    )(x2, w1_big, b1_big, w2_big, b2_big)
    return out2.reshape(N, H, W, C)


def reference_residual_block(x_nhwc, w1, b1, w2, b2):
    """Pure-JAX f32 reference (NHWC, HWIO weights)."""
    dn = lax.conv_dimension_numbers(x_nhwc.shape, w1.shape, ("NHWC", "HWIO", "NHWC"))
    h = lax.conv_general_dilated(x_nhwc, w1, (1, 1), "SAME", dimension_numbers=dn) + b1
    h = jnp.maximum(h, 0.0)
    y = lax.conv_general_dilated(h, w2, (1, 1), "SAME", dimension_numbers=dn) + b2
    return y + x_nhwc


if __name__ == "__main__":
    # Small shapes consistent with ResidualBlock(nf): batch=2, nf=8, spatial=16
    # (W * C = 128 -> exactly lane-dense).
    N, C, H, W = 2, 8, 16, 16
    key = jax.random.PRNGKey(0)
    kx, kw1, kb1, kw2, kb2 = jax.random.split(key, 5)

    # PyTorch-convention input NCHW -> transpose to NHWC for the kernel.
    x_nchw = jax.random.normal(kx, (N, C, H, W), jnp.float32)
    x_nhwc = jnp.transpose(x_nchw, (0, 2, 3, 1))

    # Deterministic "Conv2d(nf, nf, 3, 1, 1, bias=True)" parameters.
    # PyTorch weight layout is (Cout, Cin, kh, kw); store as HWIO (kh, kw, Cin, Cout).
    w1_torch = jax.random.normal(kw1, (C, C, 3, 3), jnp.float32) * 0.05
    w2_torch = jax.random.normal(kw2, (C, C, 3, 3), jnp.float32) * 0.05
    b1 = jax.random.normal(kb1, (C,), jnp.float32) * 0.05
    b2 = jax.random.normal(kb2, (C,), jnp.float32) * 0.05
    w1 = jnp.transpose(w1_torch, (2, 3, 1, 0))
    w2 = jnp.transpose(w2_torch, (2, 3, 1, 0))

    out = residual_block(x_nhwc, w1, b1, w2, b2)
    out = jax.block_until_ready(out)

    ref = reference_residual_block(x_nhwc, w1, b1, w2, b2)
    assert out.shape == (N, H, W, C)
    # bf16 MXU operands (f32 accumulation) -> looser tolerance than pure f32.
    assert jnp.allclose(out, ref, atol=2e-2, rtol=2e-2), "mismatch vs reference"

    print("KERNEL_OK")
</pallas_src>

<mosaic_0001>
module attributes {stable_mosaic.version = 11 : i64} {
  func.func @residual_block_kernel(%arg0: i32, %arg1: memref<1x32x128xf32, #tpu.memory_space<vmem>>, %arg2: memref<3x128x128xbf16, #tpu.memory_space<vmem>>, %arg3: memref<1x128xf32, #tpu.memory_space<vmem>>, %arg4: memref<3x128x128xbf16, #tpu.memory_space<vmem>>, %arg5: memref<1x128xf32, #tpu.memory_space<vmem>>, %arg6: memref<1x32x128xf32, #tpu.memory_space<vmem>>) attributes {dimension_semantics = [#tpu.dimension_semantics<parallel>], iteration_bounds = array<i64: 1>, scalar_prefetch = 0 : i64, scratch_operands = 0 : i64, tpu.core_type = #tpu.core_type<tc>, window_params = [{transform_indices = @transform_0, window_bounds = array<i64: 1, 32, 128>}, {pipeline_mode = #tpu.pipeline_mode<synchronous>, transform_indices = @transform_1, window_bounds = array<i64: 3, 128, 128>}, {pipeline_mode = #tpu.pipeline_mode<synchronous>, transform_indices = @transform_2, window_bounds = array<i64: 1, 128>}, {pipeline_mode = #tpu.pipeline_mode<synchronous>, transform_indices = @transform_3, window_bounds = array<i64: 3, 128, 128>}, {pipeline_mode = #tpu.pipeline_mode<synchronous>, transform_indices = @transform_4, window_bounds = array<i64: 1, 128>}, {transform_indices = @transform_5, window_bounds = array<i64: 1, 32, 128>}]} {
    %c0 = arith.constant 0 : index
    %c0_0 = arith.constant 0 : index
    %c0_1 = arith.constant 0 : index
    %0 = vector.load %arg1[%c0, %c0_0, %c0_1] : memref<1x32x128xf32, #tpu.memory_space<vmem>>, vector<1x32x128xf32>
    %1 = vector.shape_cast %0 : vector<1x32x128xf32> to vector<32x128xf32>
    %2 = tpu.iota {dimensions = array<i32: 0>} : vector<32x1xi32>
    %c16_i32 = arith.constant 16 : i32
    %c0_i32 = arith.constant 0 : i32
    %3 = arith.cmpi eq, %c16_i32, %c0_i32 : i32
    %c1_i32 = arith.constant 1 : i32
    %4 = arith.select %3, %c1_i32, %c16_i32 : i32
    %5 = vector.broadcast %4 : i32 to vector<32x1xi32>
    %6 = arith.remsi %2, %5 : vector<32x1xi32>
    %c0_i32_2 = arith.constant 0 : i32
    %7 = vector.broadcast %c0_i32_2 : i32 to vector<32x1xi32>
    %8 = arith.cmpi ne, %6, %7 : vector<32x1xi32>
    %c0_i32_3 = arith.constant 0 : i32
    %9 = vector.broadcast %c0_i32_3 : i32 to vector<32x1xi32>
    %10 = arith.cmpi slt, %6, %9 : vector<32x1xi32>
    %c0_i32_4 = arith.constant 0 : i32
    %11 = arith.cmpi slt, %4, %c0_i32_4 : i32
    %12 = vector.broadcast %11 : i1 to vector<32x1xi1>
    %13 = vector.broadcast %12 : vector<32x1xi1> to vector<32x1xi1>
    %14 = arith.xori %10, %13 : vector<32x1xi1>
    %15 = arith.andi %14, %8 : vector<32x1xi1>
    %16 = vector.broadcast %4 : i32 to vector<32x1xi32>
    %17 = arith.addi %6, %16 : vector<32x1xi32>
    %18 = arith.select %15, %17, %6 : vector<32x1xi1>, vector<32x1xi32>
    %c0_i32_5 = arith.constant 0 : i32
    %19 = vector.broadcast %c0_i32_5 : i32 to vector<32x1xi32>
    %20 = arith.cmpi eq, %18, %19 : vector<32x1xi32>
    %c16_i32_6 = arith.constant 16 : i32
    %c0_i32_7 = arith.constant 0 : i32
    %21 = arith.cmpi eq, %c16_i32_6, %c0_i32_7 : i32
    %c1_i32_8 = arith.constant 1 : i32
    %22 = arith.select %21, %c1_i32_8, %c16_i32_6 : i32
    %23 = vector.broadcast %22 : i32 to vector<32x1xi32>
    %24 = arith.remsi %2, %23 : vector<32x1xi32>
    %c0_i32_9 = arith.constant 0 : i32
    %25 = vector.broadcast %c0_i32_9 : i32 to vector<32x1xi32>
    %26 = arith.cmpi ne, %24, %25 : vector<32x1xi32>
    %c0_i32_10 = arith.constant 0 : i32
    %27 = vector.broadcast %c0_i32_10 : i32 to vector<32x1xi32>
    %28 = arith.cmpi slt, %24, %27 : vector<32x1xi32>
    %c0_i32_11 = arith.constant 0 : i32
    %29 = arith.cmpi slt, %22, %c0_i32_11 : i32
    %30 = vector.broadcast %29 : i1 to vector<32x1xi1>
    %31 = vector.broadcast %30 : vector<32x1xi1> to vector<32x1xi1>
    %32 = arith.xori %28, %31 : vector<32x1xi1>
    %33 = arith.andi %32, %26 : vector<32x1xi1>
    %34 = vector.broadcast %22 : i32 to vector<32x1xi32>
    %35 = arith.addi %24, %34 : vector<32x1xi32>
    %36 = arith.select %33, %35, %24 : vector<32x1xi1>, vector<32x1xi32>
    %c15_i32 = arith.constant 15 : i32
    %37 = vector.broadcast %c15_i32 : i32 to vector<32x1xi32>
    %38 = arith.cmpi eq, %36, %37 : vector<32x1xi32>
    %c1_i32_12 = arith.constant 1 : i32
    %39 = tpu.dynamic_rotate %1 by %c1_i32_12 dim 0 : vector<32x128xf32>, i32 -> vector<32x128xf32>
    %cst = arith.constant 0.000000e+00 : f32
    %40 = vector.shape_cast %20 : vector<32x1xi1> to vector<32x1xi1>
    %41 = vector.broadcast %40 : vector<32x1xi1> to vector<32x128xi1>
    %42 = vector.broadcast %cst : f32 to vector<32x128xf32>
    %43 = arith.select %41, %42, %39 : vector<32x128xi1>, vector<32x128xf32>
    %c31_i32 = arith.constant 31 : i32
    %44 = tpu.dynamic_rotate %1 by %c31_i32 dim 0 : vector<32x128xf32>, i32 -> vector<32x128xf32>
    %cst_13 = arith.constant 0.000000e+00 : f32
    %45 = vector.shape_cast %38 : vector<32x1xi1> to vector<32x1xi1>
    %46 = vector.broadcast %45 : vector<32x1xi1> to vector<32x128xi1>
    %47 = vector.broadcast %cst_13 : f32 to vector<32x128xf32>
    %48 = arith.select %46, %47, %44 : vector<32x128xi1>, vector<32x128xf32>
    %49 = arith.truncf %43 : vector<32x128xf32> to vector<32x128xbf16>
    %c0_14 = arith.constant 0 : index
    %c0_15 = arith.constant 0 : index
    %c0_16 = arith.constant 0 : index
    %50 = vector.load %arg2[%c0_14, %c0_15, %c0_16] : memref<3x128x128xbf16, #tpu.memory_space<vmem>>, vector<1x128x128xbf16>
    %51 = vector.shape_cast %50 : vector<1x128x128xbf16> to vector<128x128xbf16>
    %cst_17 = arith.constant dense<0.000000e+00> : vector<32x128xf32>
    %52 = tpu.matmul %49, %51, %cst_17 {dimension_numbers = #tpu.dot_dimension_numbers<[1], [0], [0], [1], [0, 0, 1, 1], [], []>} : vector<32x128xbf16>, vector<128x128xbf16>, vector<32x128xf32> -> vector<32x128xf32>
    %53 = arith.truncf %1 : vector<32x128xf32> to vector<32x128xbf16>
    %c1 = arith.constant 1 : index
    %c0_18 = arith.constant 0 : index
    %c0_19 = arith.constant 0 : index
    %54 = vector.load %arg2[%c1, %c0_18, %c0_19] : memref<3x128x128xbf16, #tpu.memory_space<vmem>>, vector<1x128x128xbf16>
    %55 = vector.shape_cast %54 : vector<1x128x128xbf16> to vector<128x128xbf16>
    %cst_20 = arith.constant dense<0.000000e+00> : vector<32x128xf32>
    %56 = tpu.matmul %53, %55, %cst_20 {dimension_numbers = #tpu.dot_dimension_numbers<[1], [0], [0], [1], [0, 0, 1, 1], [], []>} : vector<32x128xbf16>, vector<128x128xbf16>, vector<32x128xf32> -> vector<32x128xf32>
    %57 = arith.addf %52, %56 : vector<32x128xf32>
    %58 = arith.truncf %48 : vector<32x128xf32> to vector<32x128xbf16>
    %c2 = arith.constant 2 : index
    %c0_21 = arith.constant 0 : index
    %c0_22 = arith.constant 0 : index
    %59 = vector.load %arg2[%c2, %c0_21, %c0_22] : memref<3x128x128xbf16, #tpu.memory_space<vmem>>, vector<1x128x128xbf16>
    %60 = vector.shape_cast %59 : vector<1x128x128xbf16> to vector<128x128xbf16>
    %cst_23 = arith.constant dense<0.000000e+00> : vector<32x128xf32>
    %61 = tpu.matmul %58, %60, %cst_23 {dimension_numbers = #tpu.dot_dimension_numbers<[1], [0], [0], [1], [0, 0, 1, 1], [], []>} : vector<32x128xbf16>, vector<128x128xbf16>, vector<32x128xf32> -> vector<32x128xf32>
    %62 = arith.addf %57, %61 : vector<32x128xf32>
    %c0_24 = arith.constant 0 : index
    %c0_25 = arith.constant 0 : index
    %63 = vector.load %arg3[%c0_24, %c0_25] : memref<1x128xf32, #tpu.memory_space<vmem>>, vector<1x128xf32>
    %64 = vector.broadcast %63 : vector<1x128xf32> to vector<32x128xf32>
    %65 = arith.addf %62, %64 : vector<32x128xf32>
    %cst_26 = arith.constant 0.000000e+00 : f32
    %66 = vector.broadcast %cst_26 : f32 to vector<32x128xf32>
    %67 = arith.maximumf %65, %66 : vector<32x128xf32>
    %c1_i32_27 = arith.constant 1 : i32
    %68 = tpu.dynamic_rotate %67 by %c1_i32_27 dim 0 : vector<32x128xf32>, i32 -> vector<32x128xf32>
    %cst_28 = arith.constant 0.000000e+00 : f32
    %69 = vector.shape_cast %20 : vector<32x1xi1> to vector<32x1xi1>
    %70 = vector.broadcast %69 : vector<32x1xi1> to vector<32x128xi1>
    %71 = vector.broadcast %cst_28 : f32 to vector<32x128xf32>
    %72 = arith.select %70, %71, %68 : vector<32x128xi1>, vector<32x128xf32>
    %c31_i32_29 = arith.constant 31 : i32
    %73 = tpu.dynamic_rotate %67 by %c31_i32_29 dim 0 : vector<32x128xf32>, i32 -> vector<32x128xf32>
    %cst_30 = arith.constant 0.000000e+00 : f32
    %74 = vector.shape_cast %38 : vector<32x1xi1> to vector<32x1xi1>
    %75 = vector.broadcast %74 : vector<32x1xi1> to vector<32x128xi1>
    %76 = vector.broadcast %cst_30 : f32 to vector<32x128xf32>
    %77 = arith.select %75, %76, %73 : vector<32x128xi1>, vector<32x128xf32>
    %78 = arith.truncf %72 : vector<32x128xf32> to vector<32x128xbf16>
    %c0_31 = arith.constant 0 : index
    %c0_32 = arith.constant 0 : index
    %c0_33 = arith.constant 0 : index
    %79 = vector.load %arg4[%c0_31, %c0_32, %c0_33] : memref<3x128x128xbf16, #tpu.memory_space<vmem>>, vector<1x128x128xbf16>
    %80 = vector.shape_cast %79 : vector<1x128x128xbf16> to vector<128x128xbf16>
    %cst_34 = arith.constant dense<0.000000e+00> : vector<32x128xf32>
    %81 = tpu.matmul %78, %80, %cst_34 {dimension_numbers = #tpu.dot_dimension_numbers<[1], [0], [0], [1], [0, 0, 1, 1], [], []>} : vector<32x128xbf16>, vector<128x128xbf16>, vector<32x128xf32> -> vector<32x128xf32>
    %82 = arith.truncf %67 : vector<32x128xf32> to vector<32x128xbf16>
    %c1_35 = arith.constant 1 : index
    %c0_36 = arith.constant 0 : index
    %c0_37 = arith.constant 0 : index
    %83 = vector.load %arg4[%c1_35, %c0_36, %c0_37] : memref<3x128x128xbf16, #tpu.memory_space<vmem>>, vector<1x128x128xbf16>
    %84 = vector.shape_cast %83 : vector<1x128x128xbf16> to vector<128x128xbf16>
    %cst_38 = arith.constant dense<0.000000e+00> : vector<32x128xf32>
    %85 = tpu.matmul %82, %84, %cst_38 {dimension_numbers = #tpu.dot_dimension_numbers<[1], [0], [0], [1], [0, 0, 1, 1], [], []>} : vector<32x128xbf16>, vector<128x128xbf16>, vector<32x128xf32> -> vector<32x128xf32>
    %86 = arith.addf %81, %85 : vector<32x128xf32>
    %87 = arith.truncf %77 : vector<32x128xf32> to vector<32x128xbf16>
    %c2_39 = arith.constant 2 : index
    %c0_40 = arith.constant 0 : index
    %c0_41 = arith.constant 0 : index
    %88 = vector.load %arg4[%c2_39, %c0_40, %c0_41] : memref<3x128x128xbf16, #tpu.memory_space<vmem>>, vector<1x128x128xbf16>
    %89 = vector.shape_cast %88 : vector<1x128x128xbf16> to vector<128x128xbf16>
    %cst_42 = arith.constant dense<0.000000e+00> : vector<32x128xf32>
    %90 = tpu.matmul %87, %89, %cst_42 {dimension_numbers = #tpu.dot_dimension_numbers<[1], [0], [0], [1], [0, 0, 1, 1], [], []>} : vector<32x128xbf16>, vector<128x128xbf16>, vector<32x128xf32> -> vector<32x128xf32>
    %91 = arith.addf %86, %90 : vector<32x128xf32>
    %c0_43 = arith.constant 0 : index
    %c0_44 = arith.constant 0 : index
    %92 = vector.load %arg5[%c0_43, %c0_44] : memref<1x128xf32, #tpu.memory_space<vmem>>, vector<1x128xf32>
    %93 = vector.broadcast %92 : vector<1x128xf32> to vector<32x128xf32>
    %94 = arith.addf %91, %93 : vector<32x128xf32>
    %95 = arith.addf %94, %1 : vector<32x128xf32>
    %c0_45 = arith.constant 0 : index
    %c0_46 = arith.constant 0 : index
    %c0_47 = arith.constant 0 : index
    %96 = vector.load %arg6[%c0_45, %c0_46, %c0_47] : memref<1x32x128xf32, #tpu.memory_space<vmem>>, vector<1x32x128xf32>
    %97 = vector.shape_cast %96 : vector<1x32x128xf32> to vector<32x128xf32>
    %98 = vector.shape_cast %95 : vector<32x128xf32> to vector<1x32x128xf32>
    tpu.vector_store %arg6[%c0_45, %c0_46, %c0_47], %98 {strides = array<i32>} : memref<1x32x128xf32, #tpu.memory_space<vmem>>, vector<1x32x128xf32>,
    return
  }
  func.func @transform_0(%arg0: i32) -> (i32, i32, i32) {
    %c0_i32 = arith.constant 0 : i32
    %c0_i32_0 = arith.constant 0 : i32
    %c0_i32_1 = arith.constant 0 : i32
    return %arg0, %c0_i32, %c0_i32_0 : i32, i32, i32
  }
  func.func @transform_1(%arg0: i32) -> (i32, i32, i32) {
    %c0_i32 = arith.constant 0 : i32
    %c0_i32_0 = arith.constant 0 : i32
    %c0_i32_1 = arith.constant 0 : i32
    %c0_i32_2 = arith.constant 0 : i32
    return %c0_i32, %c0_i32_0, %c0_i32_1 : i32, i32, i32
  }
  func.func @transform_2(%arg0: i32) -> (i32, i32) {
    %c0_i32 = arith.constant 0 : i32
    %c0_i32_0 = arith.constant 0 : i32
    %c0_i32_1 = arith.constant 0 : i32
    return %c0_i32, %c0_i32_0 : i32, i32
  }
  func.func @transform_3(%arg0: i32) -> (i32, i32, i32) {
    %c0_i32 = arith.constant 0 : i32
    %c0_i32_0 = arith.constant 0 : i32
    %c0_i32_1 = arith.constant 0 : i32
    %c0_i32_2 = arith.constant 0 : i32
    return %c0_i32, %c0_i32_0, %c0_i32_1 : i32, i32, i32
  }
  func.func @transform_4(%arg0: i32) -> (i32, i32) {
    %c0_i32 = arith.constant 0 : i32
    %c0_i32_0 = arith.constant 0 : i32
    %c0_i32_1 = arith.constant 0 : i32
    return %c0_i32, %c0_i32_0 : i32, i32
  }
  func.func @transform_5(%arg0: i32) -> (i32, i32, i32) {
    %c0_i32 = arith.constant 0 : i32
    %c0_i32_0 = arith.constant 0 : i32
    %c0_i32_1 = arith.constant 0 : i32
    return %arg0, %c0_i32, %c0_i32_0 : i32, i32, i32
  }
}

</mosaic_0001>

<llo_original>
// kernel: tile.14
$region0: #{tile.14}
  %s0 = inlined_call_operand.vmem [shape: f32[16,8], index: 0, kind: input, shape index: {}]
  %s1 = inlined_call_operand.vmem [shape: f32[1,128], index: 1, kind: output, shape index: {}]
  $region1: #{tile.14} parent=0
    #allocation0 [shape = 'u8[4096]{0}', space=vmem, size = 0x1000, scoped, tag = 'scoped mem for output reshape']
    %v2 = vld [vmem:[%s0] sm:$0x1]
    %vm3 = vcmask 64512
    %4 = vst.msk [vmem:[#allocation0] sm:$0x1] %vm3, %v2
    %s5 = scalar_lea.vmem %s0, 15
    %v6 = vld [vmem:[%s5] sm:$0x1]
    %7 = vrot.lane.b32.xlu0 %v6, 120
    %v8 = vpop.permute.xlu0 %7
    %vm9 = vcmask 1048512
    %10 = vst.msk [vmem:[#allocation0] sm:$0x1] %vm9, %v8
    %s11 = scalar_lea.vmem %s0, 14
    %v12 = vld [vmem:[%s11] sm:$0x1]
    %13 = vrot.lane.b32.xlu0 %v12, 112
    %v14 = vpop.permute.xlu0 %13
    %vm15 = vcmask 982912
    %16 = vst.msk [vmem:[#allocation0] sm:$0x1] %vm15, %v14
    %s17 = scalar_lea.vmem %s0, 13
    %v18 = vld [vmem:[%s17] sm:$0x1]
    %19 = vrot.lane.b32.xlu0 %v18, 104
    %v20 = vpop.permute.xlu0 %19
    %vm21 = vcmask 917312
    %22 = vst.msk [vmem:[#allocation0] sm:$0x1] %vm21, %v20
    %s23 = scalar_lea.vmem %s0, 12
    %v24 = vld [vmem:[%s23] sm:$0x1]
    %25 = vrot.lane.b32.xlu0 %v24, 96
    %v26 = vpop.permute.xlu0 %25
    %vm27 = vcmask 851712
    %28 = vst.msk [vmem:[#allocation0] sm:$0x1] %vm27, %v26
    %s29 = scalar_lea.vmem %s0, 11
    %v30 = vld [vmem:[%s29] sm:$0x1]
    %31 = vrot.lane.b32.xlu0 %v30, 88
    %v32 = vpop.permute.xlu0 %31
    %vm33 = vcmask 786112
    %34 = vst.msk [vmem:[#allocation0] sm:$0x1] %vm33, %v32
    %s35 = scalar_lea.vmem %s0, 10
    %v36 = vld [vmem:[%s35] sm:$0x1]
    %37 = vrot.lane.b32.xlu0 %v36, 80
    %v38 = vpop.permute.xlu0 %37
    %vm39 = vcmask 720512
    %40 = vst.msk [vmem:[#allocation0] sm:$0x1] %vm39, %v38
    %s41 = scalar_lea.vmem %s0, 9
    %v42 = vld [vmem:[%s41] sm:$0x1]
    %43 = vrot.lane.b32.xlu0 %v42, 72
    %v44 = vpop.permute.xlu0 %43
    %vm45 = vcmask 654912
    %46 = vst.msk [vmem:[#allocation0] sm:$0x1] %vm45, %v44
    %s47 = scalar_lea.vmem %s0, 8
    %v48 = vld [vmem:[%s47] sm:$0x1]
    %49 = vrot.lane.b32.xlu0 %v48, 64
    %v50 = vpop.permute.xlu0 %49
    %vm51 = vcmask 589312
    %52 = vst.msk [vmem:[#allocation0] sm:$0x1] %vm51, %v50
    %s53 = scalar_lea.vmem %s0, 7
    %v54 = vld [vmem:[%s53] sm:$0x1]
    %55 = vrot.lane.b32.xlu0 %v54, 56
    %v56 = vpop.permute.xlu0 %55
    %vm57 = vcmask 523712
    %58 = vst.msk [vmem:[#allocation0] sm:$0x1] %vm57, %v56
    %s59 = scalar_lea.vmem %s0, 6
    %v60 = vld [vmem:[%s59] sm:$0x1]
    %61 = vrot.lane.b32.xlu0 %v60, 48
    %v62 = vpop.permute.xlu0 %61
    %vm63 = vcmask 458112
    %64 = vst.msk [vmem:[#allocation0] sm:$0x1] %vm63, %v62
    %s65 = scalar_lea.vmem %s0, 5
    %v66 = vld [vmem:[%s65] sm:$0x1]
    %67 = vrot.lane.b32.xlu0 %v66, 40
    %v68 = vpop.permute.xlu0 %67
    %vm69 = vcmask 392512
    %70 = vst.msk [vmem:[#allocation0] sm:$0x1] %vm69, %v68
    %s71 = scalar_lea.vmem %s0, 4
    %v72 = vld [vmem:[%s71] sm:$0x1]
    %73 = vrot.lane.b32.xlu0 %v72, 32
    %v74 = vpop.permute.xlu0 %73
    %vm75 = vcmask 326912
    %76 = vst.msk [vmem:[#allocation0] sm:$0x1] %vm75, %v74
    %s77 = scalar_lea.vmem %s0, 3
    %v78 = vld [vmem:[%s77] sm:$0x1]
    %79 = vrot.lane.b32.xlu0 %v78, 24
    %v80 = vpop.permute.xlu0 %79
    %vm81 = vcmask 261312
    %82 = vst.msk [vmem:[#allocation0] sm:$0x1] %vm81, %v80
    %s83 = scalar_lea.vmem %s0, 2
    %v84 = vld [vmem:[%s83] sm:$0x1]
    %85 = vrot.lane.b32.xlu0 %v84, 16
    %v86 = vpop.permute.xlu0 %85
    %vm87 = vcmask 195712
    %88 = vst.msk [vmem:[#allocation0] sm:$0x1] %vm87, %v86
    %s89 = scalar_lea.vmem %s0, 1
    %v90 = vld [vmem:[%s89] sm:$0x1]
    %91 = vrot.lane.b32.xlu0 %v90, 8
    %v92 = vpop.permute.xlu0 %91
    %vm93 = vcmask 130112
    %94 = vst.msk [vmem:[#allocation0] sm:$0x1] %vm93, %v92
    %s96 = sshllo.u32 0, 1
    %v98 = vld [vmem:[#allocation0] sm:%s96]
    %s99 = sshllo.u32 0, 1
    %100 = vst [vmem:[%s1] sm:%s99] %v98

// kernel: tile.13
$region0: #{tile.13}
  #allocation0 [shape = 's32[1]{0}', space=sflag, size = 0x4, scoped, tag = 'scoped memory for tile.13']
  %s0 = inlined_call_operand.vmem [shape: f32[8], index: 0, kind: input, shape index: {}]
  %s1 = inlined_call_operand.vmem [shape: f32[16,8], index: 1, kind: output, shape index: {}]
  // Predicated region
  $region2: #{tile.13} parent=0 // pred_check
    _
  $region3: #{tile.13} parent=0 // pred_check_branch
    %3 = sbr.rel (0) target = $region5
  $region4: #{tile.13} parent=0 // pred_region
    _
  $region5: #{tile.13} parent=0 // pred_fallthru
    _
  %v4 = vld [vmem:[%s0] ss:$0 sm:$0xff]
  %5 = vst [vmem:[%s1] sm:$0xff] %v4
  %s6 = scalar_lea.vmem %s1, 8
  %7 = vst [vmem:[%s6] sm:$0xff] %v4

// kernel: residual_block.1
$region0: #{residual_block.1}
  #allocation0 [shape = 'u32[]', space=smem, size = 0x4, offset = 0x4, fixed_abs, tag = 'smem constant byte address 0x4 - core index']
  #allocation1 [shape = 'u32[144,128]{1,0:T(1,128)}', space=vmem, size = 0x12000, scoped, tag = 'internal scratch']
  %s0 = inlined_call_operand.vmem [shape: f32[1,32,128], index: 0, kind: input, shape index: {}]
  %s1 = inlined_call_operand.vmem [shape: bf16[3,128,128], index: 1, kind: input, shape index: {}]
  %s2 = inlined_call_operand.vmem [shape: f32[1,128], index: 2, kind: input, shape index: {}]
  %s3 = inlined_call_operand.vmem [shape: bf16[3,128,128], index: 3, kind: input, shape index: {}]
  %s4 = inlined_call_operand.vmem [shape: f32[1,128], index: 4, kind: input, shape index: {}]
  %s5 = inlined_call_operand.vmem [shape: f32[1,32,128], index: 5, kind: output, shape index: {}]
  %s6 = sld [smem:[#allocation0]]
  $region30: #{residual_block.1} parent=0
    _
  %s8 = ssub.s32 1, %s6
  %s9 = scalar_select 0, %s8, %s6
  // Predicated region
  $region2: #{residual_block.1} parent=0 // pred_check
    _
  $region3: #{residual_block.1} parent=0 // pred_check_branch
    %11 = sbr.rel (0) target = $region5
  $region4: #{residual_block.1} parent=0 // pred_region
    _
  $region5: #{residual_block.1} parent=0 // pred_fallthru
    _
  // Predicated region
  $region6: #{residual_block.1} parent=0 // pred_check
    _
  $region7: #{residual_block.1} parent=0 // pred_check_branch
    %13 = sbr.rel (0) target = $region9
  $region8: #{residual_block.1} parent=0 // pred_region
    _
  $region9: #{residual_block.1} parent=0 // pred_fallthru
    _
  // Predicated region
  $region10: #{residual_block.1} parent=0 // pred_check
    _
  $region11: #{residual_block.1} parent=0 // pred_check_branch
    %15 = sbr.rel (0) target = $region13
  $region12: #{residual_block.1} parent=0 // pred_region
    _
  $region13: #{residual_block.1} parent=0 // pred_fallthru
    _
  // Predicated region
  $region14: #{residual_block.1} parent=0 // pred_check
    _
  $region15: #{residual_block.1} parent=0 // pred_check_branch
    %17 = sbr.rel (0) target = $region17
  $region16: #{residual_block.1} parent=0 // pred_region
    _
  $region17: #{residual_block.1} parent=0 // pred_fallthru
    _
  // Predicated region
  $region18: #{residual_block.1} parent=0 // pred_check
    _
  $region19: #{residual_block.1} parent=0 // pred_check_branch
    %19 = sbr.rel (0) target = $region21
  $region20: #{residual_block.1} parent=0 // pred_region
    _
  $region21: #{residual_block.1} parent=0 // pred_fallthru
    _
  %v21 = vld [vmem:[%s0] sm:$0xff]
  %v22 = vld [vmem:[%s0 + $0x8] sm:$0xff]
  %v23 = vld [vmem:[%s0 + $0x10] sm:$0xff]
  %v24 = vld [vmem:[%s0 + $0x18] sm:$0xff]
  %v25 = vlaneseq
  %v26 = vshrl.u32 %v25, 7
  %v27 = vadd.s32 %v26, 8
  %v28 = vadd.s32 %v26, 16
  %v29 = vadd.s32 %v26, 24
  %vm30 = vcmp.lt.s32.totalorder %v26, 0
  %v31 = vsub.s32 0, %v26
  %v32 = vsel %vm30, %v31, %v26
  %v33 = vshrl.u32 %v32, 4
  %v34 = vand.u32 %v32, 15
  %v35 = vsub.s32 0, %v34
  %v36 = vsel %vm30, %v35, %v34
  %vm37 = vcmp.lt.s32.totalorder %v27, 0
  %v38 = vsub.s32 0, %v27
  %v39 = vsel %vm37, %v38, %v27
  %v40 = vshrl.u32 %v39, 4
  %v41 = vand.u32 %v39, 15
  %v42 = vsub.s32 0, %v41
  %v43 = vsel %vm37, %v42, %v41
  %vm44 = vcmp.lt.s32.totalorder %v28, 0
  %v45 = vsub.s32 0, %v28
  %v46 = vsel %vm44, %v45, %v28
  %v47 = vshrl.u32 %v46, 4
  %v48 = vand.u32 %v46, 15
  %v49 = vsub.s32 0, %v48
  %v50 = vsel %vm44, %v49, %v48
  %vm51 = vcmp.lt.s32.totalorder %v29, 0
  %v52 = vsub.s32 0, %v29
  %v53 = vsel %vm51, %v52, %v29
  %v54 = vshrl.u32 %v53, 4
  %v55 = vand.u32 %v53, 15
  %v56 = vsub.s32 0, %v55
  %v57 = vsel %vm51, %v56, %v55
  %vm58 = vcmp.ne.s32.totalorder %v36, 0
  %vm59 = vcmp.ne.s32.totalorder %v43, 0
  %vm60 = vcmp.ne.s32.totalorder %v50, 0
  %vm61 = vcmp.ne.s32.totalorder %v57, 0
  %vm62 = vcmp.lt.s32.totalorder %v36, 0
  %vm63 = vcmp.lt.s32.totalorder %v43, 0
  %vm64 = vcmp.lt.s32.totalorder %v50, 0
  %vm65 = vcmp.lt.s32.totalorder %v57, 0
  %vm66 = vmand %vm62, %vm58
  %vm67 = vmand %vm63, %vm59
  %vm68 = vmand %vm64, %vm60
  %vm69 = vmand %vm65, %vm61
  %v70 = vadd.s32 %v36, 16
  %v71 = vadd.s32 %v43, 16
  %v72 = vadd.s32 %v50, 16
  %v73 = vadd.s32 %v57, 16
  %v74 = vsel %vm66, %v70, %v36
  %v75 = vsel %vm67, %v71, %v43
  %v76 = vsel %vm68, %v72, %v50
  %v77 = vsel %vm69, %v73, %v57
  %vm78 = vcmp.eq.s32.totalorder %v74, 0
  %vm79 = vcmp.eq.s32.totalorder %v75, 0
  %vm80 = vcmp.eq.s32.totalorder %v76, 0
  %vm81 = vcmp.eq.s32.totalorder %v77, 0
  %vm82 = vcmp.eq.s32.totalorder %v74, 15
  %vm83 = vcmp.eq.s32.totalorder %v75, 15
  %vm84 = vcmp.eq.s32.totalorder %v76, 15
  %vm85 = vcmp.eq.s32.totalorder %v77, 15
  %v86 = vrot.slane %v21, 7
  %v87 = vrot.slane %v22, 7
  %v88 = vrot.slane %v23, 7
  %v89 = vrot.slane %v24, 7
  %vm90 = vcmp.lt.s32.totalorder %v26, 1
  %v91 = vsel %vm90, %v88, %v89
  %v92 = vsel %vm90, %v87, %v88
  %v93 = vsel %vm90, %v86, %v87
  %v94 = vsel %vm90, %v89, %v86
  %v95 = vsel %vm78, 1, 0
  %v96 = vsel %vm79, 1, 0
  %v97 = vsel %vm80, 1, 0
  %v98 = vsel %vm81, 1, 0
  %vm99 = vcmp.eq.s32.totalorder %v95, 1
  %vm100 = vcmp.eq.s32.totalorder %v96, 1
  %vm101 = vcmp.eq.s32.totalorder %v97, 1
  %vm102 = vcmp.eq.s32.totalorder %v98, 1
  %v103 = vsel %vm99, 0.0, %v94
  %v104 = vsel %vm100, 0.0, %v93
  %v105 = vsel %vm101, 0.0, %v92
  %v106 = vsel %vm102, 0.0, %v91
  %v107 = vrot.slane %v21, 1
  %v108 = vrot.slane %v22, 1
  %v109 = vrot.slane %v23, 1
  %v110 = vrot.slane %v24, 1
  %vm111 = vcmp.lt.s32.totalorder %v26, 7
  %v112 = vsel %vm111, %v109, %v110
  %v113 = vsel %vm111, %v108, %v109
  %v114 = vsel %vm111, %v107, %v108
  %v115 = vsel %vm111, %v110, %v107
  %v116 = vsel %vm82, 1, 0
  %v117 = vsel %vm83, 1, 0
  %v118 = vsel %vm84, 1, 0
  %v119 = vsel %vm85, 1, 0
  %vm120 = vcmp.eq.s32.totalorder %v116, 1
  %vm121 = vcmp.eq.s32.totalorder %v117, 1
  %vm122 = vcmp.eq.s32.totalorder %v118, 1
  %vm123 = vcmp.eq.s32.totalorder %v119, 1
  %v124 = vsel %vm120, 0.0, %v114
  %v125 = vsel %vm121, 0.0, %v113
  %v126 = vsel %vm122, 0.0, %v112
  %v127 = vsel %vm123, 0.0, %v115
  %v128 = vpack.c.bf16 %v104, %v103
  %v129 = vpack.c.bf16 %v106, %v105
  %v130 = vld [vmem:[%s1] sm:$0xf]
  %v131 = vld [vmem:[%s1 + $0x4] sm:$0xf]
  %v132 = vld [vmem:[%s1 + $0x8] sm:$0xf]
  %v133 = vld [vmem:[%s1 + $0xc] sm:$0xf]
  %v134 = vld [vmem:[%s1 + $0x10] sm:$0xf]
  %v135 = vld [vmem:[%s1 + $0x14] sm:$0xf]
  %v136 = vld [vmem:[%s1 + $0x18] sm:$0xf]
  %v137 = vld [vmem:[%s1 + $0x1c] sm:$0xf]
  %v138 = vld [vmem:[%s1 + $0x20] sm:$0xf]
  %v139 = vld [vmem:[%s1 + $0x24] sm:$0xf]
  %v140 = vld [vmem:[%s1 + $0x28] sm:$0xf]
  %v141 = vld [vmem:[%s1 + $0x2c] sm:$0xf]
  %v142 = vld [vmem:[%s1 + $0x30] sm:$0xf]
  %v143 = vld [vmem:[%s1 + $0x34] sm:$0xf]
  %v144 = vld [vmem:[%s1 + $0x38] sm:$0xf]
  %v145 = vld [vmem:[%s1 + $0x3c] sm:$0xf]
  %v146 = vpack.c.bf16 %v22, %v21
  %v147 = vpack.c.bf16 %v24, %v23
  %s148 = scalar_lea.vmem %s1, 64
  %v149 = vld [vmem:[%s148] sm:$0xf]
  %v150 = vld [vmem:[%s148 + $0x4] sm:$0xf]
  %v151 = vld [vmem:[%s148 + $0x8] sm:$0xf]
  %v152 = vld [vmem:[%s148 + $0xc] sm:$0xf]
  %v153 = vld [vmem:[%s148 + $0x10] sm:$0xf]
  %v154 = vld [vmem:[%s148 + $0x14] sm:$0xf]
  %v155 = vld [vmem:[%s148 + $0x18] sm:$0xf]
  %v156 = vld [vmem:[%s148 + $0x1c] sm:$0xf]
  %v157 = vld [vmem:[%s148 + $0x20] sm:$0xf]
  %v158 = vld [vmem:[%s148 + $0x24] sm:$0xf]
  %v159 = vld [vmem:[%s148 + $0x28] sm:$0xf]
  %v160 = vld [vmem:[%s148 + $0x2c] sm:$0xf]
  %v161 = vld [vmem:[%s148 + $0x30] sm:$0xf]
  %v162 = vld [vmem:[%s148 + $0x34] sm:$0xf]
  %v163 = vld [vmem:[%s148 + $0x38] sm:$0xf]
  %v164 = vld [vmem:[%s148 + $0x3c] sm:$0xf]
  %v181 = vunpack.c.l.b16 %v149
  %v182 = vunpack.c.l.b16 %v150
  %v183 = vunpack.c.l.b16 %v151
  %v184 = vunpack.c.l.b16 %v152
  %v185 = vunpack.c.l.b16 %v153
  %v186 = vunpack.c.l.b16 %v154
  %v187 = vunpack.c.l.b16 %v155
  %v188 = vunpack.c.l.b16 %v156
  %v189 = vunpack.c.l.b16 %v157
  %v190 = vunpack.c.l.b16 %v158
  %v191 = vunpack.c.l.b16 %v159
  %v192 = vunpack.c.l.b16 %v160
  %v193 = vunpack.c.l.b16 %v161
  %v194 = vunpack.c.l.b16 %v162
  %v195 = vunpack.c.l.b16 %v163
  %v196 = vunpack.c.l.b16 %v164
  %v197 = vpack.c.b16 %v182, %v181
  %v198 = vpack.c.b16 %v184, %v183
  %v199 = vpack.c.b16 %v186, %v185
  %v200 = vpack.c.b16 %v188, %v187
  %v201 = vpack.c.b16 %v190, %v189
  %v202 = vpack.c.b16 %v192, %v191
  %v203 = vpack.c.b16 %v194, %v193
  %v204 = vpack.c.b16 %v196, %v195
  %213 = vmatprep.subr.bf16.mxu0 0
  %214 = vmatpush1.bf16.msra.mxu0 %v197
  %215 = vmatprep.subr.bf16.mxu0 0
  %216 = vmatpush1.bf16.msra.mxu0 %v198
  %217 = vmatprep.subr.bf16.mxu0 0
  %218 = vmatpush1.bf16.msra.mxu0 %v199
  %219 = vmatprep.subr.bf16.mxu0 0
  %220 = vmatpush1.bf16.msra.mxu0 %v200
  %221 = vmatprep.subr.bf16.mxu0 0
  %222 = vmatpush1.bf16.msra.mxu0 %v201
  %223 = vmatprep.subr.bf16.mxu0 0
  %224 = vmatpush1.bf16.msra.mxu0 %v202
  %225 = vmatprep.subr.bf16.mxu0 0
  %226 = vmatpush1.bf16.msra.mxu0 %v203
  %227 = vmatprep.subr.bf16.mxu0 0
  %228 = vmatpush1.bf16.msra.mxu0 %v204
  %229 = vmatprep.subr.bf16.mxu0 0
  %230 = vmatpush1.bf16.msra.mxu0 0
  %231 = vmatprep.subr.bf16.mxu0 0
  %232 = vmatpush1.bf16.msra.mxu0 0
  %233 = vmatprep.subr.bf16.mxu0 0
  %234 = vmatpush1.bf16.msra.mxu0 0
  %235 = vmatprep.subr.bf16.mxu0 0
  %236 = vmatpush1.bf16.msra.mxu0 0
  %237 = vmatprep.subr.bf16.mxu0 0
  %238 = vmatpush1.bf16.msra.mxu0 0
  %239 = vmatprep.subr.bf16.mxu0 0
  %240 = vmatpush1.bf16.msra.mxu0 0
  %241 = vmatprep.subr.bf16.mxu0 0
  %242 = vmatpush1.bf16.msra.mxu0 0
  %243 = vmatprep.subr.bf16.mxu0 0
  %244 = vmatpush1.bf16.msra.mxu0 0
  %245 = vmatprep.mubr.bf16.mxu0 0
  %246 = vmatmul.mubr.bf16.gmra.mrb[0].mxu0 %v146
  %v247 = vpop.f32.mrb[0].mxu0
  %v248 = vadd.f32 0.0, %v247
  %v249 = vpop.f32.mrb[0].mxu0
  %v250 = vpop.f32.mrb[0].mxu0
  %v251 = vadd.f32 0.0, %v250
  %v252 = vpop.f32.mrb[0].mxu0
  %253 = vmatprep.mubr.bf16.mxu0 0
  %254 = vmatmul.mubr.bf16.gmra.mrb[0].mxu0 %v147
  %v255 = vpop.f32.mrb[0].mxu0
  %v256 = vadd.f32 0.0, %v255
  %v257 = vpop.f32.mrb[0].mxu0
  %v258 = vpop.f32.mrb[0].mxu0
  %v259 = vadd.f32 0.0, %v258
  %v260 = vpop.f32.mrb[0].mxu0
  %261 = vdwg.mxu0
  %v278 = vunpack.c.l.b16 %v130
  %v279 = vunpack.c.l.b16 %v131
  %v280 = vunpack.c.l.b16 %v132
  %v281 = vunpack.c.l.b16 %v133
  %v282 = vunpack.c.l.b16 %v134
  %v283 = vunpack.c.l.b16 %v135
  %v284 = vunpack.c.l.b16 %v136
  %v285 = vunpack.c.l.b16 %v137
  %v286 = vunpack.c.l.b16 %v138
  %v287 = vunpack.c.l.b16 %v139
  %v288 = vunpack.c.l.b16 %v140
  %v289 = vunpack.c.l.b16 %v141
  %v290 = vunpack.c.l.b16 %v142
  %v291 = vunpack.c.l.b16 %v143
  %v292 = vunpack.c.l.b16 %v144
  %v293 = vunpack.c.l.b16 %v145
  %v294 = vpack.c.b16 %v279, %v278
  %v295 = vpack.c.b16 %v281, %v280
  %v296 = vpack.c.b16 %v283, %v282
  %v297 = vpack.c.b16 %v285, %v284
  %v298 = vpack.c.b16 %v287, %v286
  %v299 = vpack.c.b16 %v289, %v288
  %v300 = vpack.c.b16 %v291, %v290
  %v301 = vpack.c.b16 %v293, %v292
  %310 = vmatprep.subr.bf16.mxu0 0
  %311 = vmatpush1.bf16.msra.mxu0 %v294
  %312 = vmatprep.subr.bf16.mxu0 0
  %313 = vmatpush1.bf16.msra.mxu0 %v295
  %314 = vmatprep.subr.bf16.mxu0 0
  %315 = vmatpush1.bf16.msra.mxu0 %v296
  %316 = vmatprep.subr.bf16.mxu0 0
  %317 = vmatpush1.bf16.msra.mxu0 %v297
  %318 = vmatprep.subr.bf16.mxu0 0
  %319 = vmatpush1.bf16.msra.mxu0 %v298
  %320 = vmatprep.subr.bf16.mxu0 0
  %321 = vmatpush1.bf16.msra.mxu0 %v299
  %322 = vmatprep.subr.bf16.mxu0 0
  %323 = vmatpush1.bf16.msra.mxu0 %v300
  %324 = vmatprep.subr.bf16.mxu0 0
  %325 = vmatpush1.bf16.msra.mxu0 %v301
  %326 = vmatprep.subr.bf16.mxu0 0
  %327 = vmatpush1.bf16.msra.mxu0 0
  %328 = vmatprep.subr.bf16.mxu0 0
  %329 = vmatpush1.bf16.msra.mxu0 0
  %330 = vmatprep.subr.bf16.mxu0 0
  %331 = vmatpush1.bf16.msra.mxu0 0
  %332 = vmatprep.subr.bf16.mxu0 0
  %333 = vmatpush1.bf16.msra.mxu0 0
  %334 = vmatprep.subr.bf16.mxu0 0
  %335 = vmatpush1.bf16.msra.mxu0 0
  %336 = vmatprep.subr.bf16.mxu0 0
  %337 = vmatpush1.bf16.msra.mxu0 0
  %338 = vmatprep.subr.bf16.mxu0 0
  %339 = vmatpush1.bf16.msra.mxu0 0
  %340 = vmatprep.subr.bf16.mxu0 0
  %341 = vmatpush1.bf16.msra.mxu0 0
  %342 = vmatprep.mubr.bf16.mxu0 0
  %343 = vmatmul.mubr.bf16.gmra.mrb[0].mxu0 %v128
  %v344 = vpop.f32.mrb[0].mxu0
  %v345 = vadd.f32 %v248, %v344
  %v346 = vpop.f32.mrb[0].mxu0
  %v347 = vpop.f32.mrb[0].mxu0
  %v348 = vadd.f32 %v251, %v347
  %v349 = vpop.f32.mrb[0].mxu0
  %350 = vmatprep.mubr.bf16.mxu0 0
  %351 = vmatmul.mubr.bf16.gmra.mrb[0].mxu0 %v129
  %v352 = vpop.f32.mrb[0].mxu0
  %v353 = vadd.f32 %v256, %v352
  %v354 = vpop.f32.mrb[0].mxu0
  %v355 = vpop.f32.mrb[0].mxu0
  %v356 = vadd.f32 %v259, %v355
  %v357 = vpop.f32.mrb[0].mxu0
  %358 = vdwg.mxu0
  %v359 = vpack.c.bf16 %v125, %v124
  %v360 = vpack.c.bf16 %v127, %v126
  %s361 = scalar_lea.vmem %s1, 128
  %v362 = vld [vmem:[%s361] sm:$0xf]
  %v363 = vld [vmem:[%s361 + $0x4] sm:$0xf]
  %v364 = vld [vmem:[%s361 + $0x8] sm:$0xf]
  %v365 = vld [vmem:[%s361 + $0xc] sm:$0xf]
  %v366 = vld [vmem:[%s361 + $0x10] sm:$0xf]
  %v367 = vld [vmem:[%s361 + $0x14] sm:$0xf]
  %v368 = vld [vmem:[%s361 + $0x18] sm:$0xf]
  %v369 = vld [vmem:[%s361 + $0x1c] sm:$0xf]
  %v370 = vld [vmem:[%s361 + $0x20] sm:$0xf]
  %v371 = vld [vmem:[%s361 + $0x24] sm:$0xf]
  %v372 = vld [vmem:[%s361 + $0x28] sm:$0xf]
  %v373 = vld [vmem:[%s361 + $0x2c] sm:$0xf]
  %v374 = vld [vmem:[%s361 + $0x30] sm:$0xf]
  %v375 = vld [vmem:[%s361 + $0x34] sm:$0xf]
  %v376 = vld [vmem:[%s361 + $0x38] sm:$0xf]
  %v377 = vld [vmem:[%s361 + $0x3c] sm:$0xf]
  %v394 = vunpack.c.l.b16 %v362
  %v395 = vunpack.c.l.b16 %v363
  %v396 = vunpack.c.l.b16 %v364
  %v397 = vunpack.c.l.b16 %v365
  %v398 = vunpack.c.l.b16 %v366
  %v399 = vunpack.c.l.b16 %v367
  %v400 = vunpack.c.l.b16 %v368
  %v401 = vunpack.c.l.b16 %v369
  %v402 = vunpack.c.l.b16 %v370
  %v403 = vunpack.c.l.b16 %v371
  %v404 = vunpack.c.l.b16 %v372
  %v405 = vunpack.c.l.b16 %v373
  %v406 = vunpack.c.l.b16 %v374
  %v407 = vunpack.c.l.b16 %v375
  %v408 = vunpack.c.l.b16 %v376
  %v409 = vunpack.c.l.b16 %v377
  %v410 = vpack.c.b16 %v395, %v394
  %v411 = vpack.c.b16 %v397, %v396
  %v412 = vpack.c.b16 %v399, %v398
  %v413 = vpack.c.b16 %v401, %v400
  %v414 = vpack.c.b16 %v403, %v402
  %v415 = vpack.c.b16 %v405, %v404
  %v416 = vpack.c.b16 %v407, %v406
  %v417 = vpack.c.b16 %v409, %v408
  %426 = vmatprep.subr.bf16.mxu0 0
  %427 = vmatpush1.bf16.msra.mxu0 %v410
  %428 = vmatprep.subr.bf16.mxu0 0
  %429 = vmatpush1.bf16.msra.mxu0 %v411
  %430 = vmatprep.subr.bf16.mxu0 0
  %431 = vmatpush1.bf16.msra.mxu0 %v412
  %432 = vmatprep.subr.bf16.mxu0 0
  %433 = vmatpush1.bf16.msra.mxu0 %v413
  %434 = vmatprep.subr.bf16.mxu0 0
  %435 = vmatpush1.bf16.msra.mxu0 %v414
  %436 = vmatprep.subr.bf16.mxu0 0
  %437 = vmatpush1.bf16.msra.mxu0 %v415
  %438 = vmatprep.subr.bf16.mxu0 0
  %439 = vmatpush1.bf16.msra.mxu0 %v416
  %440 = vmatprep.subr.bf16.mxu0 0
  %441 = vmatpush1.bf16.msra.mxu0 %v417
  %442 = vmatprep.subr.bf16.mxu0 0
  %443 = vmatpush1.bf16.msra.mxu0 0
  %444 = vmatprep.subr.bf16.mxu0 0
  %445 = vmatpush1.bf16.msra.mxu0 0
  %446 = vmatprep.subr.bf16.mxu0 0
  %447 = vmatpush1.bf16.msra.mxu0 0
  %448 = vmatprep.subr.bf16.mxu0 0
  %449 = vmatpush1.bf16.msra.mxu0 0
  %450 = vmatprep.subr.bf16.mxu0 0
  %451 = vmatpush1.bf16.msra.mxu0 0
  %452 = vmatprep.subr.bf16.mxu0 0
  %453 = vmatpush1.bf16.msra.mxu0 0
  %454 = vmatprep.subr.bf16.mxu0 0
  %455 = vmatpush1.bf16.msra.mxu0 0
  %456 = vmatprep.subr.bf16.mxu0 0
  %457 = vmatpush1.bf16.msra.mxu0 0
  %458 = vmatprep.mubr.bf16.mxu0 0
  %459 = vmatmul.mubr.bf16.gmra.mrb[0].mxu0 %v359
  %v460 = vpop.f32.mrb[0].mxu0
  %v461 = vadd.f32 0.0, %v460
  %v462 = vpop.f32.mrb[0].mxu0
  %v463 = vpop.f32.mrb[0].mxu0
  %v464 = vadd.f32 0.0, %v463
  %v465 = vpop.f32.mrb[0].mxu0
  %466 = vmatprep.mubr.bf16.mxu0 0
  %467 = vmatmul.mubr.bf16.gmra.mrb[0].mxu0 %v360
  %v468 = vpop.f32.mrb[0].mxu0
  %v469 = vadd.f32 0.0, %v468
  %v470 = vpop.f32.mrb[0].mxu0
  %v471 = vpop.f32.mrb[0].mxu0
  %v472 = vadd.f32 0.0, %v471
  %v473 = vpop.f32.mrb[0].mxu0
  %474 = vdwg.mxu0
  %v475 = vadd.f32 %v345, %v461
  %v476 = vadd.f32 %v348, %v464
  %v477 = vadd.f32 %v353, %v469
  %v478 = vadd.f32 %v356, %v472
  %v479 = vld [vmem:[%s2] sm:$0x1]
  %v481 = vlaneseq
  %v482 = vshrl.u32 %v481, 7
  %v483 = vsub.s32 0, %v482
  %v484 = vrot.slane %v479, %v483
  %v486 = vadd.f32 %v475, %v484
  %v487 = vadd.f32 %v476, %v484
  %v488 = vadd.f32 %v477, %v484
  %v489 = vadd.f32 %v478, %v484
  %v490 = vmax.f32 %v486, 0.0
  %v491 = vmax.f32 %v487, 0.0
  %v492 = vmax.f32 %v488, 0.0
  %v493 = vmax.f32 %v489, 0.0
  %v494 = vrot.slane %v490, 7
  %v495 = vrot.slane %v491, 7
  %v496 = vrot.slane %v492, 7
  %v497 = vrot.slane %v493, 7
  %v498 = vsel %vm90, %v496, %v497
  %v499 = vsel %vm90, %v495, %v496
  %v500 = vsel %vm90, %v494, %v495
  %v501 = vsel %vm90, %v497, %v494
  %v502 = vsel %vm99, 0.0, %v501
  %v503 = vsel %vm100, 0.0, %v500
  %v504 = vsel %vm101, 0.0, %v499
  %v505 = vsel %vm102, 0.0, %v498
  %v506 = vrot.slane %v490, 1
  %v507 = vrot.slane %v491, 1
  %v508 = vrot.slane %v492, 1
  %v509 = vrot.slane %v493, 1
  %v510 = vsel %vm111, %v508, %v509
  %v511 = vsel %vm111, %v507, %v508
  %v512 = vsel %vm111, %v506, %v507
  %v513 = vsel %vm111, %v509, %v506
  %v514 = vsel %vm120, 0.0, %v512
  %v515 = vsel %vm121, 0.0, %v511
  %v516 = vsel %vm122, 0.0, %v510
  %v517 = vsel %vm123, 0.0, %v513
  %v518 = vpack.c.bf16 %v503, %v502
  %v519 = vpack.c.bf16 %v505, %v504
  %v520 = vld [vmem:[%s3] sm:$0xf]
  %v521 = vld [vmem:[%s3 + $0x4] sm:$0xf]
  %v522 = vld [vmem:[%s3 + $0x8] sm:$0xf]
  %v523 = vld [vmem:[%s3 + $0xc] sm:$0xf]
  %v524 = vld [vmem:[%s3 + $0x10] sm:$0xf]
  %v525 = vld [vmem:[%s3 + $0x14] sm:$0xf]
  %v526 = vld [vmem:[%s3 + $0x18] sm:$0xf]
  %v527 = vld [vmem:[%s3 + $0x1c] sm:$0xf]
  %v528 = vld [vmem:[%s3 + $0x20] sm:$0xf]
  %v529 = vld [vmem:[%s3 + $0x24] sm:$0xf]
  %v530 = vld [vmem:[%s3 + $0x28] sm:$0xf]
  %v531 = vld [vmem:[%s3 + $0x2c] sm:$0xf]
  %v532 = vld [vmem:[%s3 + $0x30] sm:$0xf]
  %v533 = vld [vmem:[%s3 + $0x34] sm:$0xf]
  %v534 = vld [vmem:[%s3 + $0x38] sm:$0xf]
  %v535 = vld [vmem:[%s3 + $0x3c] sm:$0xf]
  %v536 = vpack.c.bf16 %v491, %v490
  %v537 = vpack.c.bf16 %v493, %v492
  %s538 = scalar_lea.vmem %s3, 64
  %v539 = vld [vmem:[%s538] sm:$0xf]
  %v540 = vld [vmem:[%s538 + $0x4] sm:$0xf]
  %v541 = vld [vmem:[%s538 + $0x8] sm:$0xf]
  %v542 = vld [vmem:[%s538 + $0xc] sm:$0xf]
  %v543 = vld [vmem:[%s538 + $0x10] sm:$0xf]
  %v544 = vld [vmem:[%s538 + $0x14] sm:$0xf]
  %v545 = vld [vmem:[%s538 + $0x18] sm:$0xf]
  %v546 = vld [vmem:[%s538 + $0x1c] sm:$0xf]
  %v547 = vld [vmem:[%s538 + $0x20] sm:$0xf]
  %v548 = vld [vmem:[%s538 + $0x24] sm:$0xf]
  %v549 = vld [vmem:[%s538 + $0x28] sm:$0xf]
  %v550 = vld [vmem:[%s538 + $0x2c] sm:$0xf]
  %v551 = vld [vmem:[%s538 + $0x30] sm:$0xf]
  %v552 = vld [vmem:[%s538 + $0x34] sm:$0xf]
  %v553 = vld [vmem:[%s538 + $0x38] sm:$0xf]
  %v554 = vld [vmem:[%s538 + $0x3c] sm:$0xf]
  %v571 = vunpack.c.l.b16 %v539
  %v572 = vunpack.c.l.b16 %v540
  %v573 = vunpack.c.l.b16 %v541
  %v574 = vunpack.c.l.b16 %v542
  %v575 = vunpack.c.l.b16 %v543
  %v576 = vunpack.c.l.b16 %v544
  %v577 = vunpack.c.l.b16 %v545
  %v578 = vunpack.c.l.b16 %v546
  %v579 = vunpack.c.l.b16 %v547
  %v580 = vunpack.c.l.b16 %v548
  %v581 = vunpack.c.l.b16 %v549
  %v582 = vunpack.c.l.b16 %v550
  %v583 = vunpack.c.l.b16 %v551
  %v584 = vunpack.c.l.b16 %v552
  %v585 = vunpack.c.l.b16 %v553
  %v586 = vunpack.c.l.b16 %v554
  %v587 = vpack.c.b16 %v572, %v571
  %v588 = vpack.c.b16 %v574, %v573
  %v589 = vpack.c.b16 %v576, %v575
  %v590 = vpack.c.b16 %v578, %v577
  %v591 = vpack.c.b16 %v580, %v579
  %v592 = vpack.c.b16 %v582, %v581
  %v593 = vpack.c.b16 %v584, %v583
  %v594 = vpack.c.b16 %v586, %v585
  %603 = vmatprep.subr.bf16.mxu0 0
  %604 = vmatpush1.bf16.msra.mxu0 %v587
  %605 = vmatprep.subr.bf16.mxu0 0
  %606 = vmatpush1.bf16.msra.mxu0 %v588
  %607 = vmatprep.subr.bf16.mxu0 0
  %608 = vmatpush1.bf16.msra.mxu0 %v589
  %609 = vmatprep.subr.bf16.mxu0 0
  %610 = vmatpush1.bf16.msra.mxu0 %v590
  %611 = vmatprep.subr.bf16.mxu0 0
  %612 = vmatpush1.bf16.msra.mxu0 %v591
  %613 = vmatprep.subr.bf16.mxu0 0
  %614 = vmatpush1.bf16.msra.mxu0 %v592
  %615 = vmatprep.subr.bf16.mxu0 0
  %616 = vmatpush1.bf16.msra.mxu0 %v593
  %617 = vmatprep.subr.bf16.mxu0 0
  %618 = vmatpush1.bf16.msra.mxu0 %v594
  %619 = vmatprep.subr.bf16.mxu0 0
  %620 = vmatpush1.bf16.msra.mxu0 0
  %621 = vmatprep.subr.bf16.mxu0 0
  %622 = vmatpush1.bf16.msra.mxu0 0
  %623 = vmatprep.subr.bf16.mxu0 0
  %624 = vmatpush1.bf16.msra.mxu0 0
  %625 = vmatprep.subr.bf16.mxu0 0
  %626 = vmatpush1.bf16.msra.mxu0 0
  %627 = vmatprep.subr.bf16.mxu0 0
  %628 = vmatpush1.bf16.msra.mxu0 0
  %629 = vmatprep.subr.bf16.mxu0 0
  %630 = vmatpush1.bf16.msra.mxu0 0
  %631 = vmatprep.subr.bf16.mxu0 0
  %632 = vmatpush1.bf16.msra.mxu0 0
  %633 = vmatprep.subr.bf16.mxu0 0
  %634 = vmatpush1.bf16.msra.mxu0 0
  %635 = vmatprep.mubr.bf16.mxu0 0
  %636 = vmatmul.mubr.bf16.gmra.mrb[0].mxu0 %v536
  %v637 = vpop.f32.mrb[0].mxu0
  %v638 = vadd.f32 0.0, %v637
  %v639 = vpop.f32.mrb[0].mxu0
  %v640 = vpop.f32.mrb[0].mxu0
  %v641 = vadd.f32 0.0, %v640
  %v642 = vpop.f32.mrb[0].mxu0
  %643 = vmatprep.mubr.bf16.mxu0 0
  %644 = vmatmul.mubr.bf16.gmra.mrb[0].mxu0 %v537
  %v645 = vpop.f32.mrb[0].mxu0
  %v646 = vadd.f32 0.0, %v645
  %v647 = vpop.f32.mrb[0].mxu0
  %v648 = vpop.f32.mrb[0].mxu0
  %v649 = vadd.f32 0.0, %v648
  %v650 = vpop.f32.mrb[0].mxu0
  %651 = vdwg.mxu0
  %v668 = vunpack.c.l.b16 %v520
  %v669 = vunpack.c.l.b16 %v521
  %v670 = vunpack.c.l.b16 %v522
  %v671 = vunpack.c.l.b16 %v523
  %v672 = vunpack.c.l.b16 %v524
  %v673 = vunpack.c.l.b16 %v525
  %v674 = vunpack.c.l.b16 %v526
  %v675 = vunpack.c.l.b16 %v527
  %v676 = vunpack.c.l.b16 %v528
  %v677 = vunpack.c.l.b16 %v529
  %v678 = vunpack.c.l.b16 %v530
  %v679 = vunpack.c.l.b16 %v531
  %v680 = vunpack.c.l.b16 %v532
  %v681 = vunpack.c.l.b16 %v533
  %v682 = vunpack.c.l.b16 %v534
  %v683 = vunpack.c.l.b16 %v535
  %v684 = vpack.c.b16 %v669, %v668
  %v685 = vpack.c.b16 %v671, %v670
  %v686 = vpack.c.b16 %v673, %v672
  %v687 = vpack.c.b16 %v675, %v674
  %v688 = vpack.c.b16 %v677, %v676
  %v689 = vpack.c.b16 %v679, %v678
  %v690 = vpack.c.b16 %v681, %v680
  %v691 = vpack.c.b16 %v683, %v682
  %700 = vmatprep.subr.bf16.mxu0 0
  %701 = vmatpush1.bf16.msra.mxu0 %v684
  %702 = vmatprep.subr.bf16.mxu0 0
  %703 = vmatpush1.bf16.msra.mxu0 %v685
  %704 = vmatprep.subr.bf16.mxu0 0
  %705 = vmatpush1.bf16.msra.mxu0 %v686
  %706 = vmatprep.subr.bf16.mxu0 0
  %707 = vmatpush1.bf16.msra.mxu0 %v687
  %708 = vmatprep.subr.bf16.mxu0 0
  %709 = vmatpush1.bf16.msra.mxu0 %v688
  %710 = vmatprep.subr.bf16.mxu0 0
  %711 = vmatpush1.bf16.msra.mxu0 %v689
  %712 = vmatprep.subr.bf16.mxu0 0
  %713 = vmatpush1.bf16.msra.mxu0 %v690
  %714 = vmatprep.subr.bf16.mxu0 0
  %715 = vmatpush1.bf16.msra.mxu0 %v691
  %716 = vmatprep.subr.bf16.mxu0 0
  %717 = vmatpush1.bf16.msra.mxu0 0
  %718 = vmatprep.subr.bf16.mxu0 0
  %719 = vmatpush1.bf16.msra.mxu0 0
  %720 = vmatprep.subr.bf16.mxu0 0
  %721 = vmatpush1.bf16.msra.mxu0 0
  %722 = vmatprep.subr.bf16.mxu0 0
  %723 = vmatpush1.bf16.msra.mxu0 0
  %724 = vmatprep.subr.bf16.mxu0 0
  %725 = vmatpush1.bf16.msra.mxu0 0
  %726 = vmatprep.subr.bf16.mxu0 0
  %727 = vmatpush1.bf16.msra.mxu0 0
  %728 = vmatprep.subr.bf16.mxu0 0
  %729 = vmatpush1.bf16.msra.mxu0 0
  %730 = vmatprep.subr.bf16.mxu0 0
  %731 = vmatpush1.bf16.msra.mxu0 0
  %732 = vmatprep.mubr.bf16.mxu0 0
  %733 = vmatmul.mubr.bf16.gmra.mrb[0].mxu0 %v518
  %v734 = vpop.f32.mrb[0].mxu0
  %v735 = vadd.f32 %v638, %v734
  %v736 = vpop.f32.mrb[0].mxu0
  %v737 = vpop.f32.mrb[0].mxu0
  %v738 = vadd.f32 %v641, %v737
  %v739 = vpop.f32.mrb[0].mxu0
  %740 = vmatprep.mubr.bf16.mxu0 0
  %741 = vmatmul.mubr.bf16.gmra.mrb[0].mxu0 %v519
  %v742 = vpop.f32.mrb[0].mxu0
  %v743 = vadd.f32 %v646, %v742
  %v744 = vpop.f32.mrb[0].mxu0
  %v745 = vpop.f32.mrb[0].mxu0
  %v746 = vadd.f32 %v649, %v745
  %v747 = vpop.f32.mrb[0].mxu0
  %748 = vdwg.mxu0
  %v749 = vpack.c.bf16 %v515, %v514
  %v750 = vpack.c.bf16 %v517, %v516
  %s751 = scalar_lea.vmem %s3, 128
  %v752 = vld [vmem:[%s751] sm:$0xf]
  %v753 = vld [vmem:[%s751 + $0x4] sm:$0xf]
  %v754 = vld [vmem:[%s751 + $0x8] sm:$0xf]
  %v755 = vld [vmem:[%s751 + $0xc] sm:$0xf]
  %v756 = vld [vmem:[%s751 + $0x10] sm:$0xf]
  %v757 = vld [vmem:[%s751 + $0x14] sm:$0xf]
  %v758 = vld [vmem:[%s751 + $0x18] sm:$0xf]
  %v759 = vld [vmem:[%s751 + $0x1c] sm:$0xf]
  %v760 = vld [vmem:[%s751 + $0x20] sm:$0xf]
  %v761 = vld [vmem:[%s751 + $0x24] sm:$0xf]
  %v762 = vld [vmem:[%s751 + $0x28] sm:$0xf]
  %v763 = vld [vmem:[%s751 + $0x2c] sm:$0xf]
  %v764 = vld [vmem:[%s751 + $0x30] sm:$0xf]
  %v765 = vld [vmem:[%s751 + $0x34] sm:$0xf]
  %v766 = vld [vmem:[%s751 + $0x38] sm:$0xf]
  %v767 = vld [vmem:[%s751 + $0x3c] sm:$0xf]
  %v784 = vunpack.c.l.b16 %v752
  %v785 = vunpack.c.l.b16 %v753
  %v786 = vunpack.c.l.b16 %v754
  %v787 = vunpack.c.l.b16 %v755
  %v788 = vunpack.c.l.b16 %v756
  %v789 = vunpack.c.l.b16 %v757
  %v790 = vunpack.c.l.b16 %v758
  %v791 = vunpack.c.l.b16 %v759
  %v792 = vunpack.c.l.b16 %v760
  %v793 = vunpack.c.l.b16 %v761
  %v794 = vunpack.c.l.b16 %v762
  %v795 = vunpack.c.l.b16 %v763
  %v796 = vunpack.c.l.b16 %v764
  %v797 = vunpack.c.l.b16 %v765
  %v798 = vunpack.c.l.b16 %v766
  %v799 = vunpack.c.l.b16 %v767
  %v800 = vpack.c.b16 %v785, %v784
  %v801 = vpack.c.b16 %v787, %v786
  %v802 = vpack.c.b16 %v789, %v788
  %v803 = vpack.c.b16 %v791, %v790
  %v804 = vpack.c.b16 %v793, %v792
  %v805 = vpack.c.b16 %v795, %v794
  %v806 = vpack.c.b16 %v797, %v796
  %v807 = vpack.c.b16 %v799, %v798
  %816 = vmatprep.subr.bf16.mxu0 0
  %817 = vmatpush1.bf16.msra.mxu0 %v800
  %818 = vmatprep.subr.bf16.mxu0 0
  %819 = vmatpush1.bf16.msra.mxu0 %v801
  %820 = vmatprep.subr.bf16.mxu0 0
  %821 = vmatpush1.bf16.msra.mxu0 %v802
  %822 = vmatprep.subr.bf16.mxu0 0
  %823 = vmatpush1.bf16.msra.mxu0 %v803
  %824 = vmatprep.subr.bf16.mxu0 0
  %825 = vmatpush1.bf16.msra.mxu0 %v804
  %826 = vmatprep.subr.bf16.mxu0 0
  %827 = vmatpush1.bf16.msra.mxu0 %v805
  %828 = vmatprep.subr.bf16.mxu0 0
  %829 = vmatpush1.bf16.msra.mxu0 %v806
  %830 = vmatprep.subr.bf16.mxu0 0
  %831 = vmatpush1.bf16.msra.mxu0 %v807
  %832 = vmatprep.subr.bf16.mxu0 0
  %833 = vmatpush1.bf16.msra.mxu0 0
  %834 = vmatprep.subr.bf16.mxu0 0
  %835 = vmatpush1.bf16.msra.mxu0 0
  %836 = vmatprep.subr.bf16.mxu0 0
  %837 = vmatpush1.bf16.msra.mxu0 0
  %838 = vmatprep.subr.bf16.mxu0 0
  %839 = vmatpush1.bf16.msra.mxu0 0
  %840 = vmatprep.subr.bf16.mxu0 0
  %841 = vmatpush1.bf16.msra.mxu0 0
  %842 = vmatprep.subr.bf16.mxu0 0
  %843 = vmatpush1.bf16.msra.mxu0 0
  %844 = vmatprep.subr.bf16.mxu0 0
  %845 = vmatpush1.bf16.msra.mxu0 0
  %846 = vmatprep.subr.bf16.mxu0 0
  %847 = vmatpush1.bf16.msra.mxu0 0
  %848 = vmatprep.mubr.bf16.mxu0 0
  %849 = vmatmul.mubr.bf16.gmra.mrb[0].mxu0 %v749
  %v850 = vpop.f32.mrb[0].mxu0
  %v851 = vadd.f32 0.0, %v850
  %v852 = vpop.f32.mrb[0].mxu0
  %v853 = vpop.f32.mrb[0].mxu0
  %v854 = vadd.f32 0.0, %v853
  %v855 = vpop.f32.mrb[0].mxu0
  %856 = vmatprep.mubr.bf16.mxu0 0
  %857 = vmatmul.mubr.bf16.gmra.mrb[0].mxu0 %v750
  %v858 = vpop.f32.mrb[0].mxu0
  %v859 = vadd.f32 0.0, %v858
  %v860 = vpop.f32.mrb[0].mxu0
  %v861 = vpop.f32.mrb[0].mxu0
  %v862 = vadd.f32 0.0, %v861
  %v863 = vpop.f32.mrb[0].mxu0
  %864 = vdwg.mxu0
  %v865 = vadd.f32 %v735, %v851
  %v866 = vadd.f32 %v738, %v854
  %v867 = vadd.f32 %v743, %v859
  %v868 = vadd.f32 %v746, %v862
  %v869 = vld [vmem:[%s4] sm:$0x1]
  %v871 = vlaneseq
  %v872 = vshrl.u32 %v871, 7
  %v873 = vsub.s32 0, %v872
  %v874 = vrot.slane %v869, %v873
  %v876 = vadd.f32 %v865, %v874
  %v877 = vadd.f32 %v866, %v874
  %v878 = vadd.f32 %v867, %v874
  %v879 = vadd.f32 %v868, %v874
  %v880 = vadd.f32 %v876, %v21
  %v881 = vadd.f32 %v877, %v22
  %v882 = vadd.f32 %v878, %v23
  %v883 = vadd.f32 %v879, %v24
  %884 = vst [vmem:[%s5] sm:$0xff] %v880
  %885 = vst [vmem:[%s5 + $0x8] sm:$0xff] %v881
  %886 = vst [vmem:[%s5 + $0x10] sm:$0xff] %v882
  %887 = vst [vmem:[%s5 + $0x18] sm:$0xff] %v883
  // Predicated region
  $region22: #{residual_block.1} parent=0 // pred_check
    _
  $region23: #{residual_block.1} parent=0 // pred_check_branch
    %889 = sbr.rel (0) target = $region25
  $region24: #{residual_block.1} parent=0 // pred_region
    _
  $region25: #{residual_block.1} parent=0 // pred_fallthru
    _
  // Predicated region
  $region26: #{residual_block.1} parent=0 // pred_check
    _
  $region27: #{residual_block.1} parent=0 // pred_check_branch
    %891 = sbr.rel (0) target = $region29
  $region28: #{residual_block.1} parent=0 // pred_region
    _
  $region29: #{residual_block.1} parent=0 // pred_fallthru
    _

</llo_original>
